<compile_context>
chip_gen: v5e
topology: v5e:2x2
jax: 0.10.0
libtpu: 0.0.40
codegen_flags: <defaults>
</compile_context>

<pallas_src>
import functools

import jax
import jax.numpy as jnp
from jax.experimental import pallas as pl
from jax.experimental.pallas import tpu as pltpu

_ALIGN = 16  # bf16 sublane-tile height; keeps every slab section tile-aligned


def _round_up(n, m):
    return ((n + m - 1) // m) * m


def lstm_kernel(x_ref, w_ref, out_ref, h0_ref, c0_ref, h1_ref, c1_ref, *,
                d, h, r_ih0, r_hh0, r_ih1, r_hh1, r_lin, r_b0, r_b1, r_bl):
    """One time step (grid axis 0 = T).

    x_ref:   (B, d)   f32 current-step input (leading T dim squeezed by BlockSpec)
    w_ref:   (R, 4h)  bf16 packed weight slab, resident (constant index_map)
    out_ref: (B, 4h)  f32 lane-padded head output (wrapper slices [:output_dim])
    h*/c*:   (B, h)   f32 VMEM scratch carrying recurrent state across grid steps
    """
    t = pl.program_id(0)
    h4 = 4 * h
    f32 = jnp.float32

    @pl.when(t == 0)
    def _init():
        h0_ref[...] = jnp.zeros_like(h0_ref)
        c0_ref[...] = jnp.zeros_like(c0_ref)
        h1_ref[...] = jnp.zeros_like(h1_ref)
        c1_ref[...] = jnp.zeros_like(c1_ref)

    x = x_ref[...]

    # Static, tile-aligned slices of the resident slab.  Weights are bf16 in VMEM and
    # converted to f32 at use; activations never leave f32 (v5e-safe).
    wih0 = w_ref[r_ih0:r_ih0 + d, :].astype(f32)
    whh0 = w_ref[r_hh0:r_hh0 + h, :].astype(f32)
    wih1 = w_ref[r_ih1:r_ih1 + h, :].astype(f32)
    whh1 = w_ref[r_hh1:r_hh1 + h, :].astype(f32)
    wlin = w_ref[r_lin:r_lin + h, :].astype(f32)
    b0 = w_ref[r_b0:r_b0 + 1, :].astype(f32)
    b1 = w_ref[r_b1:r_b1 + 1, :].astype(f32)
    blin = w_ref[r_bl:r_bl + 1, :].astype(f32)

    def cell(inp, h_prev, c_prev, wih, whh, b):
        # Full LSTM cell (recurrent matmul + forget gate kept: exact for any T).
        # Gate lanes: [ i | f | g | o ], each h wide.
        gates = (jnp.dot(inp, wih, preferred_element_type=f32)
                 + jnp.dot(h_prev, whh, preferred_element_type=f32) + b)
        sig = jax.nn.sigmoid(gates)            # one full-vreg EUP pass (i, f, o used)
        th = jnp.tanh(gates)                   # one full-vreg EUP pass (g used)
        # Bring g (lanes [2h:3h]) onto the i lanes; 2h == -2h (mod 4h) so the rotation
        # direction is irrelevant; runs on the XLU, off the VPU/EUP critical slots.
        g_on_i = pltpu.roll(th, 2 * h, axis=1)
        ig = (sig * g_on_i)[:, 0:h]            # i * g
        f = sig[:, h:2 * h]
        o = sig[:, 3 * h:h4]
        c_new = f * c_prev + ig
        h_new = o * jnp.tanh(c_new)
        return h_new, c_new

    h0, c0 = cell(x, h0_ref[...], c0_ref[...], wih0, whh0, b0)
    h0_ref[...] = h0
    c0_ref[...] = c0
    # TODO(synk): inter-layer dropout(p=0.25) is training-mode only; eval == identity.
    h1, c1 = cell(h0, h1_ref[...], c1_ref[...], wih1, whh1, b1)
    h1_ref[...] = h1
    c1_ref[...] = c1

    # Linear head, lane-padded to 4h so the store is a dense (unmasked) vst.
    out_ref[...] = jnp.dot(h1, wlin, preferred_element_type=f32) + blin


def pack_params(raw, input_dim, hidden_dim, output_dim):
    """Pack transposed weights + pre-summed biases into a single bf16 slab.

    Section row offsets (all on 16-row bf16-tile boundaries, lane width = 4H):
      W_ih0^T, W_hh0^T, W_ih1^T, W_hh1^T, W_lin^T (cols >= output_dim zero),
      then one row each for (b_ih0+b_hh0), (b_ih1+b_hh1), b_lin (zero-padded).
    """
    (w_ih0, w_hh0, b_ih0, b_hh0,
     w_ih1, w_hh1, b_ih1, b_hh1,
     w_lin, b_lin) = raw
    h4 = 4 * hidden_dim
    assert output_dim <= h4

    r_ih0 = 0
    r_hh0 = r_ih0 + _round_up(input_dim, _ALIGN)
    r_ih1 = r_hh0 + _round_up(hidden_dim, _ALIGN)
    r_hh1 = r_ih1 + _round_up(hidden_dim, _ALIGN)
    r_lin = r_hh1 + _round_up(hidden_dim, _ALIGN)
    r_b0 = r_lin + _round_up(hidden_dim, _ALIGN)
    r_b1 = r_b0 + _ALIGN
    r_bl = r_b1 + _ALIGN
    rows = r_bl + _ALIGN

    slab = jnp.zeros((rows, h4), jnp.float32)
    slab = slab.at[r_ih0:r_ih0 + input_dim, :].set(w_ih0.T)
    slab = slab.at[r_hh0:r_hh0 + hidden_dim, :].set(w_hh0.T)
    slab = slab.at[r_ih1:r_ih1 + hidden_dim, :].set(w_ih1.T)
    slab = slab.at[r_hh1:r_hh1 + hidden_dim, :].set(w_hh1.T)
    slab = slab.at[r_lin:r_lin + hidden_dim, :output_dim].set(w_lin.T)
    slab = slab.at[r_b0, :].set(b_ih0 + b_hh0)
    slab = slab.at[r_b1, :].set(b_ih1 + b_hh1)
    slab = slab.at[r_bl, :output_dim].set(b_lin)

    offsets = dict(r_ih0=r_ih0, r_hh0=r_hh0, r_ih1=r_ih1, r_hh1=r_hh1,
                   r_lin=r_lin, r_b0=r_b0, r_b1=r_b1, r_bl=r_bl)
    return slab.astype(jnp.bfloat16), offsets


def lstm_forward(x_seq, slab, offsets, *, hidden_dim, output_dim):
    """x_seq: (T, batch, input_dim) f32 -> (T, batch, output_dim).

    The whole sequence runs in ONE kernel launch: grid over T, recurrent state in VMEM
    scratch, weight slab resident (constant index_map -> single DMA).  For the original
    module's forward, T == 1 (input viewed as (1, batch, input_dim)).
    """
    seq_len, batch, input_dim = x_seq.shape
    h4 = 4 * hidden_dim
    # Fill the MXU M dimension / vreg sublanes: pad batch to a multiple of 8.
    bp = _round_up(max(batch, 1), 8)
    if bp != batch:
        x_seq = jnp.pad(x_seq, ((0, 0), (0, bp - batch), (0, 0)))

    kernel = functools.partial(lstm_kernel, d=input_dim, h=hidden_dim, **offsets)
    out = pl.pallas_call(
        kernel,
        out_shape=jax.ShapeDtypeStruct((seq_len, bp, h4), jnp.float32),
        grid_spec=pltpu.PrefetchScalarGridSpec(
            num_scalar_prefetch=0,
            grid=(seq_len,),
            in_specs=[
                pl.BlockSpec((None, bp, input_dim), lambda t: (t, 0, 0)),  # per-step x
                pl.BlockSpec(slab.shape, lambda t: (0, 0)),                # resident W
            ],
            out_specs=pl.BlockSpec((None, bp, h4), lambda t: (t, 0, 0)),
            scratch_shapes=[pltpu.VMEM((bp, hidden_dim), jnp.float32)
                            for _ in range(4)],  # h0, c0, h1, c1
        ),
        compiler_params=pltpu.CompilerParams(
            dimension_semantics=("arbitrary",)),  # T is recurrent
    )(x_seq, slab)
    return out[:, :batch, :output_dim]


def init_raw_params(key, input_dim, hidden_dim, output_dim):
    """Same shapes / init ranges as nn.LSTM(num_layers=2) + nn.Linear."""
    ks = jax.random.split(key, 10)
    bound = 1.0 / jnp.sqrt(hidden_dim)

    def u(k, shape):
        return jax.random.uniform(k, shape, jnp.float32, -bound, bound)

    w_ih0 = u(ks[0], (4 * hidden_dim, input_dim))
    w_hh0 = u(ks[1], (4 * hidden_dim, hidden_dim))
    b_ih0 = u(ks[2], (4 * hidden_dim,))
    b_hh0 = u(ks[3], (4 * hidden_dim,))
    w_ih1 = u(ks[4], (4 * hidden_dim, hidden_dim))
    w_hh1 = u(ks[5], (4 * hidden_dim, hidden_dim))
    b_ih1 = u(ks[6], (4 * hidden_dim,))
    b_hh1 = u(ks[7], (4 * hidden_dim,))
    w_lin = u(ks[8], (output_dim, hidden_dim))
    b_lin = u(ks[9], (output_dim,))
    return (w_ih0, w_hh0, b_ih0, b_hh0, w_ih1, w_hh1, b_ih1, b_hh1, w_lin, b_lin)


def prepare_ref_params(raw, *, quantize):
    """Collapse to (w_ih0, w_hh0, b0, w_ih1, w_hh1, b1, w_lin, b_lin); optionally apply
    the same bf16 rounding the packed slab applies."""
    (w_ih0, w_hh0, b_ih0, b_hh0, w_ih1, w_hh1, b_ih1, b_hh1, w_lin, b_lin) = raw
    q = ((lambda a: a.astype(jnp.bfloat16).astype(jnp.float32)) if quantize
         else (lambda a: a))
    return (q(w_ih0), q(w_hh0), q(b_ih0 + b_hh0),
            q(w_ih1), q(w_hh1), q(b_ih1 + b_hh1),
            q(w_lin), q(b_lin))


def reference_forward(x_seq, params, hidden_dim):
    """Pure-JAX reference of the full PyTorch math (recurrence + forget gate), eval-mode
    dropout, over all T steps."""
    w_ih0, w_hh0, b0, w_ih1, w_hh1, b1, w_lin, b_lin = params
    seq_len, batch, _ = x_seq.shape
    H = hidden_dim
    h0 = c0 = h1 = c1 = jnp.zeros((batch, H), jnp.float32)

    def cell(inp, hp, cp, w_ih, w_hh, b):
        g = inp @ w_ih.T + hp @ w_hh.T + b
        i = jax.nn.sigmoid(g[:, :H])
        f = jax.nn.sigmoid(g[:, H:2 * H])
        gg = jnp.tanh(g[:, 2 * H:3 * H])
        o = jax.nn.sigmoid(g[:, 3 * H:])
        c = f * cp + i * gg
        return o * jnp.tanh(c), c

    outs = []
    for t in range(seq_len):
        h0, c0 = cell(x_seq[t], h0, c0, w_ih0, w_hh0, b0)
        h1, c1 = cell(h0, h1, c1, w_ih1, w_hh1, b1)
        outs.append(h1 @ w_lin.T + b_lin)
    return jnp.stack(outs)


if __name__ == "__main__":
    batch_size, input_dim, hidden_dim, output_dim = 2, 8, 32, 1

    key = jax.random.PRNGKey(0)
    k_x, k_seq, k_p = jax.random.split(key, 3)

    raw = init_raw_params(k_p, input_dim, hidden_dim, output_dim)
    slab, offsets = pack_params(raw, input_dim, hidden_dim, output_dim)
    ref_q = prepare_ref_params(raw, quantize=True)    # same bf16 weights as the kernel
    ref_f = prepare_ref_params(raw, quantize=False)   # original f32 weights

    # --- Case 1: the module's forward (input viewed as (1, batch, input_dim)). ---
    x = jax.random.normal(k_x, (batch_size, input_dim), dtype=jnp.float32)
    x_step = x.reshape(1, batch_size, input_dim)
    out = lstm_forward(x_step, slab, offsets,
                       hidden_dim=hidden_dim, output_dim=output_dim)
    out = jax.block_until_ready(out)
    assert out.shape == (1, batch_size, output_dim)
    assert jnp.allclose(out, reference_forward(x_step, ref_q, hidden_dim),
                        atol=2e-3, rtol=2e-3)
    assert jnp.allclose(out, reference_forward(x_step, ref_f, hidden_dim),
                        atol=5e-2, rtol=5e-2)  # bf16-weight vs f32-weight fidelity

    # --- Case 2: 8 decode steps in ONE kernel launch (validates the in-kernel time
    #     loop: recurrent matmuls, forget gate, state carried in VMEM scratch). ---
    seq_len = 8
    x_seq = jax.random.normal(k_seq, (seq_len, batch_size, input_dim), jnp.float32)
    out_seq = lstm_forward(x_seq, slab, offsets,
                           hidden_dim=hidden_dim, output_dim=output_dim)
    out_seq = jax.block_until_ready(out_seq)
    assert out_seq.shape == (seq_len, batch_size, output_dim)
    assert jnp.allclose(out_seq, reference_forward(x_seq, ref_q, hidden_dim),
                        atol=2e-3, rtol=2e-3)

    print("KERNEL_OK")
</pallas_src>

<mosaic_0001>
module attributes {stable_mosaic.version = 11 : i64} {
  func.func @lstm_kernel(%arg0: i32, %arg1: memref<1x8x8xf32, #tpu.memory_space<vmem>>, %arg2: memref<192x128xbf16, #tpu.memory_space<vmem>>, %arg3: memref<1x8x128xf32, #tpu.memory_space<vmem>>, %arg4: memref<8x32xf32, #tpu.memory_space<vmem>>, %arg5: memref<8x32xf32, #tpu.memory_space<vmem>>, %arg6: memref<8x32xf32, #tpu.memory_space<vmem>>, %arg7: memref<8x32xf32, #tpu.memory_space<vmem>>) attributes {dimension_semantics = [#tpu.dimension_semantics<arbitrary>], iteration_bounds = array<i64: 1>, scalar_prefetch = 0 : i64, scratch_operands = 4 : i64, tpu.core_type = #tpu.core_type<tc>, window_params = [{transform_indices = @transform_0, window_bounds = array<i64: 1, 8, 8>}, {pipeline_mode = #tpu.pipeline_mode<synchronous>, transform_indices = @transform_1, window_bounds = array<i64: 192, 128>}, {transform_indices = @transform_2, window_bounds = array<i64: 1, 8, 128>}]} {
    %c0_i32 = arith.constant 0 : i32
    %0 = arith.cmpi eq, %arg0, %c0_i32 : i32
    %1 = arith.extui %0 : i1 to i32
    %c0_i32_0 = arith.constant 0 : i32
    %2 = arith.cmpi ne, %1, %c0_i32_0 : i32
    scf.if %2 {
      %cst_38 = arith.constant 0.000000e+00 : f32
      %75 = vector.broadcast %cst_38 : f32 to vector<8x32xf32>
      %c0_39 = arith.constant 0 : index
      %c0_40 = arith.constant 0 : index
      %76 = vector.load %arg4[%c0_39, %c0_40] : memref<8x32xf32, #tpu.memory_space<vmem>>, vector<8x32xf32>
      tpu.vector_store %arg4[%c0_39, %c0_40], %75 {strides = array<i32>} : memref<8x32xf32, #tpu.memory_space<vmem>>, vector<8x32xf32>,
      %cst_41 = arith.constant 0.000000e+00 : f32
      %77 = vector.broadcast %cst_41 : f32 to vector<8x32xf32>
      %c0_42 = arith.constant 0 : index
      %c0_43 = arith.constant 0 : index
      %78 = vector.load %arg5[%c0_42, %c0_43] : memref<8x32xf32, #tpu.memory_space<vmem>>, vector<8x32xf32>
      tpu.vector_store %arg5[%c0_42, %c0_43], %77 {strides = array<i32>} : memref<8x32xf32, #tpu.memory_space<vmem>>, vector<8x32xf32>,
      %cst_44 = arith.constant 0.000000e+00 : f32
      %79 = vector.broadcast %cst_44 : f32 to vector<8x32xf32>
      %c0_45 = arith.constant 0 : index
      %c0_46 = arith.constant 0 : index
      %80 = vector.load %arg6[%c0_45, %c0_46] : memref<8x32xf32, #tpu.memory_space<vmem>>, vector<8x32xf32>
      tpu.vector_store %arg6[%c0_45, %c0_46], %79 {strides = array<i32>} : memref<8x32xf32, #tpu.memory_space<vmem>>, vector<8x32xf32>,
      %cst_47 = arith.constant 0.000000e+00 : f32
      %81 = vector.broadcast %cst_47 : f32 to vector<8x32xf32>
      %c0_48 = arith.constant 0 : index
      %c0_49 = arith.constant 0 : index
      %82 = vector.load %arg7[%c0_48, %c0_49] : memref<8x32xf32, #tpu.memory_space<vmem>>, vector<8x32xf32>
      tpu.vector_store %arg7[%c0_48, %c0_49], %81 {strides = array<i32>} : memref<8x32xf32, #tpu.memory_space<vmem>>, vector<8x32xf32>,
    } else {
    }
    %c0 = arith.constant 0 : index
    %c0_1 = arith.constant 0 : index
    %c0_2 = arith.constant 0 : index
    %3 = vector.load %arg1[%c0, %c0_1, %c0_2] : memref<1x8x8xf32, #tpu.memory_space<vmem>>, vector<1x8x8xf32>
    %4 = vector.shape_cast %3 : vector<1x8x8xf32> to vector<8x8xf32>
    %c0_3 = arith.constant 0 : index
    %c0_4 = arith.constant 0 : index
    %5 = vector.load %arg2[%c0_3, %c0_4] : memref<192x128xbf16, #tpu.memory_space<vmem>>, vector<8x128xbf16>
    %6 = arith.extf %5 : vector<8x128xbf16> to vector<8x128xf32>
    %c16 = arith.constant 16 : index
    %c0_5 = arith.constant 0 : index
    %7 = vector.load %arg2[%c16, %c0_5] : memref<192x128xbf16, #tpu.memory_space<vmem>>, vector<32x128xbf16>
    %8 = arith.extf %7 : vector<32x128xbf16> to vector<32x128xf32>
    %c48 = arith.constant 48 : index
    %c0_6 = arith.constant 0 : index
    %9 = vector.load %arg2[%c48, %c0_6] : memref<192x128xbf16, #tpu.memory_space<vmem>>, vector<32x128xbf16>
    %10 = arith.extf %9 : vector<32x128xbf16> to vector<32x128xf32>
    %c80 = arith.constant 80 : index
    %c0_7 = arith.constant 0 : index
    %11 = vector.load %arg2[%c80, %c0_7] : memref<192x128xbf16, #tpu.memory_space<vmem>>, vector<32x128xbf16>
    %12 = arith.extf %11 : vector<32x128xbf16> to vector<32x128xf32>
    %c112 = arith.constant 112 : index
    %c0_8 = arith.constant 0 : index
    %13 = vector.load %arg2[%c112, %c0_8] : memref<192x128xbf16, #tpu.memory_space<vmem>>, vector<32x128xbf16>
    %14 = arith.extf %13 : vector<32x128xbf16> to vector<32x128xf32>
    %c144 = arith.constant 144 : index
    %c0_9 = arith.constant 0 : index
    %15 = vector.load %arg2[%c144, %c0_9] : memref<192x128xbf16, #tpu.memory_space<vmem>>, vector<1x128xbf16>
    %16 = arith.extf %15 : vector<1x128xbf16> to vector<1x128xf32>
    %c160 = arith.constant 160 : index
    %c0_10 = arith.constant 0 : index
    %17 = vector.load %arg2[%c160, %c0_10] : memref<192x128xbf16, #tpu.memory_space<vmem>>, vector<1x128xbf16>
    %18 = arith.extf %17 : vector<1x128xbf16> to vector<1x128xf32>
    %c176 = arith.constant 176 : index
    %c0_11 = arith.constant 0 : index
    %19 = vector.load %arg2[%c176, %c0_11] : memref<192x128xbf16, #tpu.memory_space<vmem>>, vector<1x128xbf16>
    %20 = arith.extf %19 : vector<1x128xbf16> to vector<1x128xf32>
    %c0_12 = arith.constant 0 : index
    %c0_13 = arith.constant 0 : index
    %21 = vector.load %arg4[%c0_12, %c0_13] : memref<8x32xf32, #tpu.memory_space<vmem>>, vector<8x32xf32>
    %c0_14 = arith.constant 0 : index
    %c0_15 = arith.constant 0 : index
    %22 = vector.load %arg5[%c0_14, %c0_15] : memref<8x32xf32, #tpu.memory_space<vmem>>, vector<8x32xf32>
    %cst = arith.constant dense<0.000000e+00> : vector<8x128xf32>
    %23 = tpu.matmul %4, %6, %cst {dimension_numbers = #tpu.dot_dimension_numbers<[1], [0], [0], [1], [0, 0, 1, 1], [], []>} : vector<8x8xf32>, vector<8x128xf32>, vector<8x128xf32> -> vector<8x128xf32>
    %cst_16 = arith.constant dense<0.000000e+00> : vector<8x128xf32>
    %24 = tpu.matmul %21, %8, %cst_16 {dimension_numbers = #tpu.dot_dimension_numbers<[1], [0], [0], [1], [0, 0, 1, 1], [], []>} : vector<8x32xf32>, vector<32x128xf32>, vector<8x128xf32> -> vector<8x128xf32>
    %25 = arith.addf %23, %24 : vector<8x128xf32>
    %26 = vector.broadcast %16 : vector<1x128xf32> to vector<8x128xf32>
    %27 = arith.addf %25, %26 : vector<8x128xf32>
    %28 = arith.negf %27 : vector<8x128xf32>
    %29 = math.exp %28 : vector<8x128xf32>
    %cst_17 = arith.constant 1.000000e+00 : f32
    %30 = vector.broadcast %cst_17 : f32 to vector<8x128xf32>
    %31 = arith.addf %30, %29 : vector<8x128xf32>
    %32 = arith.divf %30, %31 : vector<8x128xf32>
    %33 = math.tanh %27 : vector<8x128xf32>
    %c64_i32 = arith.constant 64 : i32
    %34 = tpu.dynamic_rotate %33 by %c64_i32 dim 1 : vector<8x128xf32>, i32 -> vector<8x128xf32>
    %35 = arith.mulf %32, %34 : vector<8x128xf32>
    %36 = vector.extract_strided_slice %35 {offsets = [0, 0], sizes = [8, 32], strides = [1, 1]} : vector<8x128xf32> to vector<8x32xf32>
    %37 = vector.extract_strided_slice %32 {offsets = [0, 32], sizes = [8, 32], strides = [1, 1]} : vector<8x128xf32> to vector<8x32xf32>
    %38 = vector.extract_strided_slice %32 {offsets = [0, 96], sizes = [8, 32], strides = [1, 1]} : vector<8x128xf32> to vector<8x32xf32>
    %39 = arith.mulf %37, %22 : vector<8x32xf32>
    %40 = arith.addf %39, %36 : vector<8x32xf32>
    %41 = math.tanh %40 : vector<8x32xf32>
    %42 = arith.mulf %38, %41 : vector<8x32xf32>
    %c0_18 = arith.constant 0 : index
    %c0_19 = arith.constant 0 : index
    %43 = vector.load %arg4[%c0_18, %c0_19] : memref<8x32xf32, #tpu.memory_space<vmem>>, vector<8x32xf32>
    tpu.vector_store %arg4[%c0_18, %c0_19], %42 {strides = array<i32>} : memref<8x32xf32, #tpu.memory_space<vmem>>, vector<8x32xf32>,
    %c0_20 = arith.constant 0 : index
    %c0_21 = arith.constant 0 : index
    %44 = vector.load %arg5[%c0_20, %c0_21] : memref<8x32xf32, #tpu.memory_space<vmem>>, vector<8x32xf32>
    tpu.vector_store %arg5[%c0_20, %c0_21], %40 {strides = array<i32>} : memref<8x32xf32, #tpu.memory_space<vmem>>, vector<8x32xf32>,
    %c0_22 = arith.constant 0 : index
    %c0_23 = arith.constant 0 : index
    %45 = vector.load %arg6[%c0_22, %c0_23] : memref<8x32xf32, #tpu.memory_space<vmem>>, vector<8x32xf32>
    %c0_24 = arith.constant 0 : index
    %c0_25 = arith.constant 0 : index
    %46 = vector.load %arg7[%c0_24, %c0_25] : memref<8x32xf32, #tpu.memory_space<vmem>>, vector<8x32xf32>
    %cst_26 = arith.constant dense<0.000000e+00> : vector<8x128xf32>
    %47 = tpu.matmul %42, %10, %cst_26 {dimension_numbers = #tpu.dot_dimension_numbers<[1], [0], [0], [1], [0, 0, 1, 1], [], []>} : vector<8x32xf32>, vector<32x128xf32>, vector<8x128xf32> -> vector<8x128xf32>
    %cst_27 = arith.constant dense<0.000000e+00> : vector<8x128xf32>
    %48 = tpu.matmul %45, %12, %cst_27 {dimension_numbers = #tpu.dot_dimension_numbers<[1], [0], [0], [1], [0, 0, 1, 1], [], []>} : vector<8x32xf32>, vector<32x128xf32>, vector<8x128xf32> -> vector<8x128xf32>
    %49 = arith.addf %47, %48 : vector<8x128xf32>
    %50 = vector.broadcast %18 : vector<1x128xf32> to vector<8x128xf32>
    %51 = arith.addf %49, %50 : vector<8x128xf32>
    %52 = arith.negf %51 : vector<8x128xf32>
    %53 = math.exp %52 : vector<8x128xf32>
    %cst_28 = arith.constant 1.000000e+00 : f32
    %54 = vector.broadcast %cst_28 : f32 to vector<8x128xf32>
    %55 = arith.addf %54, %53 : vector<8x128xf32>
    %56 = arith.divf %54, %55 : vector<8x128xf32>
    %57 = math.tanh %51 : vector<8x128xf32>
    %c64_i32_29 = arith.constant 64 : i32
    %58 = tpu.dynamic_rotate %57 by %c64_i32_29 dim 1 : vector<8x128xf32>, i32 -> vector<8x128xf32>
    %59 = arith.mulf %56, %58 : vector<8x128xf32>
    %60 = vector.extract_strided_slice %59 {offsets = [0, 0], sizes = [8, 32], strides = [1, 1]} : vector<8x128xf32> to vector<8x32xf32>
    %61 = vector.extract_strided_slice %56 {offsets = [0, 32], sizes = [8, 32], strides = [1, 1]} : vector<8x128xf32> to vector<8x32xf32>
    %62 = vector.extract_strided_slice %56 {offsets = [0, 96], sizes = [8, 32], strides = [1, 1]} : vector<8x128xf32> to vector<8x32xf32>
    %63 = arith.mulf %61, %46 : vector<8x32xf32>
    %64 = arith.addf %63, %60 : vector<8x32xf32>
    %65 = math.tanh %64 : vector<8x32xf32>
    %66 = arith.mulf %62, %65 : vector<8x32xf32>
    %c0_30 = arith.constant 0 : index
    %c0_31 = arith.constant 0 : index
    %67 = vector.load %arg6[%c0_30, %c0_31] : memref<8x32xf32, #tpu.memory_space<vmem>>, vector<8x32xf32>
    tpu.vector_store %arg6[%c0_30, %c0_31], %66 {strides = array<i32>} : memref<8x32xf32, #tpu.memory_space<vmem>>, vector<8x32xf32>,
    %c0_32 = arith.constant 0 : index
    %c0_33 = arith.constant 0 : index
    %68 = vector.load %arg7[%c0_32, %c0_33] : memref<8x32xf32, #tpu.memory_space<vmem>>, vector<8x32xf32>
    tpu.vector_store %arg7[%c0_32, %c0_33], %64 {strides = array<i32>} : memref<8x32xf32, #tpu.memory_space<vmem>>, vector<8x32xf32>,
    %cst_34 = arith.constant dense<0.000000e+00> : vector<8x128xf32>
    %69 = tpu.matmul %66, %14, %cst_34 {dimension_numbers = #tpu.dot_dimension_numbers<[1], [0], [0], [1], [0, 0, 1, 1], [], []>} : vector<8x32xf32>, vector<32x128xf32>, vector<8x128xf32> -> vector<8x128xf32>
    %70 = vector.broadcast %20 : vector<1x128xf32> to vector<8x128xf32>
    %71 = arith.addf %69, %70 : vector<8x128xf32>
    %c0_35 = arith.constant 0 : index
    %c0_36 = arith.constant 0 : index
    %c0_37 = arith.constant 0 : index
    %72 = vector.load %arg3[%c0_35, %c0_36, %c0_37] : memref<1x8x128xf32, #tpu.memory_space<vmem>>, vector<1x8x128xf32>
    %73 = vector.shape_cast %72 : vector<1x8x128xf32> to vector<8x128xf32>
    %74 = vector.shape_cast %71 : vector<8x128xf32> to vector<1x8x128xf32>
    tpu.vector_store %arg3[%c0_35, %c0_36, %c0_37], %74 {strides = array<i32>} : memref<1x8x128xf32, #tpu.memory_space<vmem>>, vector<1x8x128xf32>,
    return
  }
  func.func @transform_0(%arg0: i32) -> (i32, i32, i32) {
    %c0_i32 = arith.constant 0 : i32
    %c0_i32_0 = arith.constant 0 : i32
    %c0_i32_1 = arith.constant 0 : i32
    return %arg0, %c0_i32, %c0_i32_0 : i32, i32, i32
  }
  func.func @transform_1(%arg0: i32) -> (i32, i32) {
    %c0_i32 = arith.constant 0 : i32
    %c0_i32_0 = arith.constant 0 : i32
    %c0_i32_1 = arith.constant 0 : i32
    return %c0_i32, %c0_i32_0 : i32, i32
  }
  func.func @transform_2(%arg0: i32) -> (i32, i32, i32) {
    %c0_i32 = arith.constant 0 : i32
    %c0_i32_0 = arith.constant 0 : i32
    %c0_i32_1 = arith.constant 0 : i32
    return %arg0, %c0_i32, %c0_i32_0 : i32, i32, i32
  }
}

</mosaic_0001>

<llo_original>
// kernel: tpu_custom_call.1
$region0: #{tpu_custom_call.1}
  #allocation0 [shape = 'u32[]', space=smem, size = 0x4, offset = 0x4, fixed_abs, tag = 'smem constant byte address 0x4 - core index']
  #allocation1 [shape = 'u32[72,128]{1,0:T(1,128)}', space=vmem, size = 0x9000, scoped, tag = 'internal scratch']
  #allocation2 [shape = 'f32[8,32]{1,0:T(8,128)}', space=vmem, size = 0x1000, scoped, tag = 'scratch operand']
  #allocation3 [shape = 'f32[8,32]{1,0:T(8,128)}', space=vmem, size = 0x1000, scoped, tag = 'scratch operand']
  #allocation4 [shape = 'f32[8,32]{1,0:T(8,128)}', space=vmem, size = 0x1000, scoped, tag = 'scratch operand']
  #allocation5 [shape = 'f32[8,32]{1,0:T(8,128)}', space=vmem, size = 0x1000, scoped, tag = 'scratch operand']
  %s0 = inlined_call_operand.hbm [shape: f32[1,8,8], index: 0, kind: input, shape index: {}]
  %s1 = inlined_call_operand.hbm [shape: bf16[192,128], index: 1, kind: input, shape index: {}]
  %s2 = inlined_call_operand.hbm [shape: f32[1,8,128], index: 2, kind: output, shape index: {}]
  %s3 = sld [smem:[#allocation0]]
  $region30: #{tpu_custom_call.1} parent=0
    _
  %s5 = ssub.s32 1, %s3
  %s6 = scalar_select 0, %s5, %s3
  $region1: #{tpu_custom_call.1} parent=0
    #allocation6 [shape = 'u8[4096]{0}', space=vmem, size = 0x1000, scoped, tag = 'input window, operand 0, single buffered']
    #allocation7 [shape = 's32[1]{0}', space=sflag, size = 0x4, scoped, tag = 'scoped memory for tpu_custom_call.1']
    #allocation8 [shape = 's32[1]{0}', space=sflag, size = 0x4, scoped, tag = 'scoped memory for tpu_custom_call.1']
    #allocation9 [shape = 'u8[49152]{0}', space=vmem, size = 0xc000, scoped, tag = 'input window, operand 1, single buffered']
    #allocation10 [shape = 's32[1]{0}', space=sflag, size = 0x4, scoped, tag = 'scoped memory for tpu_custom_call.1']
    #allocation11 [shape = 'u8[4096]{0}', space=vmem, size = 0x1000, scoped, tag = 'output window, operand 0, single buffered']
    %7 = vsyncpa [#allocation7], 0
    %8 = vsyncpa [#allocation10], 0
    %9 = vsyncpa [#allocation8], 0
    // Predicated region
    $region2: #{tpu_custom_call.1} parent=1 // pred_check
      _
    $region3: #{tpu_custom_call.1} parent=1 // pred_check_branch
      %11 = sbr.rel (0) target = $region5
    $region4: #{tpu_custom_call.1} parent=1 // pred_region
      %13 = vsyncadd [#allocation7], 0
      %s15 = sshll.u32 %s0, 4
      %s16 = int_to_ptr.hbm [resolvable:$true] %s15
      %s17 = sshll.u32 [#allocation6], 4
      %s18 = int_to_ptr.vmem [resolvable:$true] %s17
      %20 = dma.hbm_to_vmem [thread:$0]  %s16, 128, %s18, [#allocation7]
    $region5: #{tpu_custom_call.1} parent=1 // pred_fallthru
      _
    // Predicated region
    $region6: #{tpu_custom_call.1} parent=1 // pred_check
      _
    $region7: #{tpu_custom_call.1} parent=1 // pred_check_branch
      %22 = sbr.rel (0) target = $region9
    $region8: #{tpu_custom_call.1} parent=1 // pred_region
      %24 = vsyncadd [#allocation10], 0
      %s25 = sshll.u32 %s1, 4
      %s26 = int_to_ptr.hbm [resolvable:$true] %s25
      %s27 = sshll.u32 [#allocation9], 4
      %s28 = int_to_ptr.vmem [resolvable:$true] %s27
      %33 = dma.hbm_to_vmem [thread:$0]  %s26, 1536, %s28, [#allocation10], 64, 64, 4
    $region9: #{tpu_custom_call.1} parent=1 // pred_fallthru
      _
    // Predicated region
    $region10: #{tpu_custom_call.1} parent=1 // pred_check
      _
    $region11: #{tpu_custom_call.1} parent=1 // pred_check_branch
      %35 = sbr.rel (0) target = $region13
    $region12: #{tpu_custom_call.1} parent=1 // pred_region
      %37 = dma.done [#allocation7], 128
    $region13: #{tpu_custom_call.1} parent=1 // pred_fallthru
      _
    // Predicated region
    $region14: #{tpu_custom_call.1} parent=1 // pred_check
      _
    $region15: #{tpu_custom_call.1} parent=1 // pred_check_branch
      %39 = sbr.rel (0) target = $region17
    $region16: #{tpu_custom_call.1} parent=1 // pred_region
      %41 = dma.done [#allocation10], 1536
    $region17: #{tpu_custom_call.1} parent=1 // pred_fallthru
      _
    %p42 = scmp.eq.s32.totalorder 0, 0
    // Predicated region
    $region18: #{tpu_custom_call.1} parent=1 // pred_check
      %p43 = pneg %p42
    $region19: #{tpu_custom_call.1} parent=1 // pred_check_branch
      %45 = sbr.rel (%p43) target = $region21
    $region20: #{tpu_custom_call.1} parent=1 // pred_region
      %vm46 = vcmask 261120
      %47 = vst.msk [vmem:[#allocation2] sm:$0xff] %vm46, 0.0
      %48 = vst.msk [vmem:[#allocation3] sm:$0xff] %vm46, 0.0
      %49 = vst.msk [vmem:[#allocation4] sm:$0xff] %vm46, 0.0
      %50 = vst.msk [vmem:[#allocation5] sm:$0xff] %vm46, 0.0
    $region21: #{tpu_custom_call.1} parent=1 // pred_fallthru
      _
    %v51 = vld [vmem:[#allocation6] sm:$0xff]
    %v52 = vld [vmem:[#allocation9] sm:$0xf]
    %v53 = vunpack.c.l.bf16 %v52
    %v54 = vld [vmem:[#allocation9 + $0x8] sm:$0xf]
    %v55 = vld [vmem:[#allocation9 + $0xc] sm:$0xf]
    %v56 = vld [vmem:[#allocation9 + $0x10] sm:$0xf]
    %v57 = vld [vmem:[#allocation9 + $0x14] sm:$0xf]
    %v58 = vunpack.c.l.bf16 %v54
    %v59 = vunpack.c.l.bf16 %v55
    %v60 = vunpack.c.l.bf16 %v56
    %v61 = vunpack.c.l.bf16 %v57
    %v62 = vld [vmem:[#allocation9 + $0x18] sm:$0xf]
    %v63 = vld [vmem:[#allocation9 + $0x1c] sm:$0xf]
    %v64 = vld [vmem:[#allocation9 + $0x20] sm:$0xf]
    %v65 = vld [vmem:[#allocation9 + $0x24] sm:$0xf]
    %v66 = vunpack.c.l.bf16 %v62
    %v67 = vunpack.c.l.bf16 %v63
    %v68 = vunpack.c.l.bf16 %v64
    %v69 = vunpack.c.l.bf16 %v65
    %v70 = vld [vmem:[#allocation9 + $0x28] sm:$0xf]
    %v71 = vld [vmem:[#allocation9 + $0x2c] sm:$0xf]
    %v72 = vld [vmem:[#allocation9 + $0x30] sm:$0xf]
    %v73 = vld [vmem:[#allocation9 + $0x34] sm:$0xf]
    %v74 = vunpack.c.l.bf16 %v70
    %v75 = vunpack.c.l.bf16 %v71
    %v76 = vunpack.c.l.bf16 %v72
    %v77 = vunpack.c.l.bf16 %v73
    %v78 = vld [vmem:[#allocation9 + $0x38] sm:$0xf]
    %v79 = vld [vmem:[#allocation9 + $0x3c] sm:$0xf]
    %v80 = vld [vmem:[#allocation9 + $0x40] sm:$0xf]
    %v81 = vld [vmem:[#allocation9 + $0x44] sm:$0xf]
    %v82 = vunpack.c.l.bf16 %v78
    %v83 = vunpack.c.l.bf16 %v79
    %v84 = vunpack.c.l.bf16 %v80
    %v85 = vunpack.c.l.bf16 %v81
    %v86 = vld [vmem:[#allocation9 + $0x48] sm:$0x1]
    %v87 = vunpack.c.l.bf16 %v86
    %v88 = vld [vmem:[#allocation9 + $0x50] sm:$0x1]
    %v89 = vunpack.c.l.bf16 %v88
    %v90 = vld [vmem:[#allocation9 + $0x58] sm:$0x1]
    %v91 = vunpack.c.l.bf16 %v90
    %v92 = vld [vmem:[#allocation2] sm:$0xff]
    %v93 = vld [vmem:[#allocation3] sm:$0xff]
    %vm94 = vcmask 261120
    %v96 = vsel %vm94, %v92, 0
    %98 = vmatpush.msra.mxu0 0.0
    %99 = vmatpush.msra.mxu0 0.0
    %100 = vmatpush.msra.mxu0 0.0
    %101 = vmatpush.msra.mxu0 0.0
    %102 = vmatpush.msra.mxu0 0.0
    %103 = vmatpush.msra.mxu0 0.0
    %104 = vmatpush.msra.mxu0 0.0
    %105 = vmatpush.msra.mxu0 0.0
    %106 = vmatpush.msra.mxu0 0.0
    %107 = vmatpush.msra.mxu0 0.0
    %108 = vmatpush.msra.mxu0 0.0
    %109 = vmatpush.msra.mxu0 0.0
    %110 = vmatpush.msra.mxu0 %v61
    %111 = vmatpush.msra.mxu0 %v60
    %112 = vmatpush.msra.mxu0 %v59
    %113 = vmatpush.msra.mxu0 %v58
    %114 = vmatmul.f32.gmra.mxu0 %v96
    %v115 = vpop.f32.mrf.mxu0
    %v116 = vadd.f32 0.0, %v115
    %117 = vdwg.mxu0
    %vm118 = vcmask 64512
    %v120 = vsel %vm118, %v51, 0
    %122 = vmatpush.msra.mxu0 0.0
    %123 = vmatpush.msra.mxu0 0.0
    %124 = vmatpush.msra.mxu0 0.0
    %125 = vmatpush.msra.mxu0 0.0
    %126 = vmatpush.msra.mxu0 0.0
    %127 = vmatpush.msra.mxu0 0.0
    %128 = vmatpush.msra.mxu0 0.0
    %129 = vmatpush.msra.mxu0 0.0
    %130 = vmatpush.msra.mxu0 0.0
    %131 = vmatpush.msra.mxu0 0.0
    %132 = vmatpush.msra.mxu0 0.0
    %133 = vmatpush.msra.mxu0 0.0
    %134 = vmatpush.msra.mxu0 0.0
    %135 = vmatpush.msra.mxu0 0.0
    %136 = vmatpush.msra.mxu0 0.0
    %137 = vmatpush.msra.mxu0 %v53
    %138 = vmatmul.f32.gmra.mxu0 %v120
    %v139 = vpop.f32.mrf.mxu0
    %v140 = vadd.f32 %v116, %v139
    %141 = vdwg.mxu0
    %v142 = vperm.slane %v87, 0
    %v143 = vadd.f32 %v140, %v142
    %v144 = vxor.u32 %v143, 2147483648
    %v145 = vmul.f32 %v144, 1.442695
    %v146 = vpow.pop %v145
    %v147 = vadd.f32 %v146, 1.0
    %v148 = vrcp.pop %v147
    %v149 = vmul.f32 %v147, %v148
    %v150 = vsub.f32 1.0, %v149
    %v151 = vmul.f32 %v148, %v150
    %v152 = vadd.f32 %v148, %v151
    %vm153 = vweird.f32 %v147
    %vm154 = vweird.f32 %v148
    %vm155 = vmor %vm153, %vm154
    %v156 = vsel %vm155, %v148, %v152
    %v157 = vand.u32 2147483647, %v147
    %vm158 = vcmp.eq.f32.partialorder %v157, 8.507059e+37
    %v159 = vand.u32 %v147, 2147483648
    %v160 = vor.u32 1.1754944e-38, %v159
    %v161 = vsel %vm158, %v160, %v156
    %v162 = vmul.f32 1.0, %v161
    %v163 = vtanh.pop %v143
    %164 = vrot.lane.b32.xlu0 %v163, 64
    %v165 = vpop.permute.xlu0 %164
    %v166 = vmul.f32 %v162, %v165
    %168 = vrot.lane.b32.xlu0 %v93, 32
    %v169 = vpop.permute.xlu0 %168
    %v171 = vmul.f32 %v162, %v169
    %173 = vrot.lane.b32.xlu0 %v166, 32
    %v174 = vpop.permute.xlu0 %173
    %v176 = vadd.f32 %v171, %v174
    %v177 = vtanh.pop %v176
    %179 = vrot.lane.b32.xlu0 %v177, 64
    %v180 = vpop.permute.xlu0 %179
    %v182 = vmul.f32 %v162, %v180
    %184 = vrot.lane.b32.xlu0 %v182, 32
    %v185 = vpop.permute.xlu0 %184
    %187 = vst.msk [vmem:[#allocation2] sm:$0xff] %vm94, %v185
    %189 = vrot.lane.b32.xlu0 %v176, 96
    %v190 = vpop.permute.xlu0 %189
    %192 = vst.msk [vmem:[#allocation3] sm:$0xff] %vm94, %v190
    %v193 = vld [vmem:[#allocation4] sm:$0xff]
    %v194 = vld [vmem:[#allocation5] sm:$0xff]
    %v196 = vsel %vm94, %v193, 0
    %198 = vmatpush.msra.mxu0 0.0
    %199 = vmatpush.msra.mxu0 0.0
    %200 = vmatpush.msra.mxu0 0.0
    %201 = vmatpush.msra.mxu0 0.0
    %202 = vmatpush.msra.mxu0 0.0
    %203 = vmatpush.msra.mxu0 0.0
    %204 = vmatpush.msra.mxu0 0.0
    %205 = vmatpush.msra.mxu0 0.0
    %206 = vmatpush.msra.mxu0 0.0
    %207 = vmatpush.msra.mxu0 0.0
    %208 = vmatpush.msra.mxu0 0.0
    %209 = vmatpush.msra.mxu0 0.0
    %210 = vmatpush.msra.mxu0 %v77
    %211 = vmatpush.msra.mxu0 %v76
    %212 = vmatpush.msra.mxu0 %v75
    %213 = vmatpush.msra.mxu0 %v74
    %214 = vmatmul.f32.gmra.mxu0 %v196
    %v215 = vpop.f32.mrf.mxu0
    %v216 = vadd.f32 0.0, %v215
    %217 = vdwg.mxu0
    %v218 = vsel %vm94, %v185, 0
    %220 = vmatpush.msra.mxu0 0.0
    %221 = vmatpush.msra.mxu0 0.0
    %222 = vmatpush.msra.mxu0 0.0
    %223 = vmatpush.msra.mxu0 0.0
    %224 = vmatpush.msra.mxu0 0.0
    %225 = vmatpush.msra.mxu0 0.0
    %226 = vmatpush.msra.mxu0 0.0
    %227 = vmatpush.msra.mxu0 0.0
    %228 = vmatpush.msra.mxu0 0.0
    %229 = vmatpush.msra.mxu0 0.0
    %230 = vmatpush.msra.mxu0 0.0
    %231 = vmatpush.msra.mxu0 0.0
    %232 = vmatpush.msra.mxu0 %v69
    %233 = vmatpush.msra.mxu0 %v68
    %234 = vmatpush.msra.mxu0 %v67
    %235 = vmatpush.msra.mxu0 %v66
    %236 = vmatmul.f32.gmra.mxu0 %v218
    %v237 = vpop.f32.mrf.mxu0
    %v238 = vadd.f32 %v216, %v237
    %239 = vdwg.mxu0
    %v240 = vperm.slane %v89, 0
    %v241 = vadd.f32 %v238, %v240
    %v242 = vxor.u32 %v241, 2147483648
    %v243 = vmul.f32 %v242, 1.442695
    %v244 = vpow.pop %v243
    %v245 = vadd.f32 %v244, 1.0
    %v246 = vrcp.pop %v245
    %v247 = vmul.f32 %v245, %v246
    %v248 = vsub.f32 1.0, %v247
    %v249 = vmul.f32 %v246, %v248
    %v250 = vadd.f32 %v246, %v249
    %vm251 = vweird.f32 %v245
    %vm252 = vweird.f32 %v246
    %vm253 = vmor %vm251, %vm252
    %v254 = vsel %vm253, %v246, %v250
    %v255 = vand.u32 2147483647, %v245
    %vm256 = vcmp.eq.f32.partialorder %v255, 8.507059e+37
    %v257 = vand.u32 %v245, 2147483648
    %v258 = vor.u32 1.1754944e-38, %v257
    %v259 = vsel %vm256, %v258, %v254
    %v260 = vmul.f32 1.0, %v259
    %v261 = vtanh.pop %v241
    %262 = vrot.lane.b32.xlu0 %v261, 64
    %v263 = vpop.permute.xlu0 %262
    %v264 = vmul.f32 %v260, %v263
    %266 = vrot.lane.b32.xlu0 %v194, 32
    %v267 = vpop.permute.xlu0 %266
    %v269 = vmul.f32 %v260, %v267
    %271 = vrot.lane.b32.xlu0 %v264, 32
    %v272 = vpop.permute.xlu0 %271
    %v274 = vadd.f32 %v269, %v272
    %v275 = vtanh.pop %v274
    %277 = vrot.lane.b32.xlu0 %v275, 64
    %v278 = vpop.permute.xlu0 %277
    %v280 = vmul.f32 %v260, %v278
    %282 = vrot.lane.b32.xlu0 %v280, 32
    %v283 = vpop.permute.xlu0 %282
    %285 = vst.msk [vmem:[#allocation4] sm:$0xff] %vm94, %v283
    %287 = vrot.lane.b32.xlu0 %v274, 96
    %v288 = vpop.permute.xlu0 %287
    %290 = vst.msk [vmem:[#allocation5] sm:$0xff] %vm94, %v288
    %v291 = vperm.slane %v91, 0
    %v292 = vsel %vm94, %v283, 0
    %294 = vmatpush.msra.mxu0 0.0
    %295 = vmatpush.msra.mxu0 0.0
    %296 = vmatpush.msra.mxu0 0.0
    %297 = vmatpush.msra.mxu0 0.0
    %298 = vmatpush.msra.mxu0 0.0
    %299 = vmatpush.msra.mxu0 0.0
    %300 = vmatpush.msra.mxu0 0.0
    %301 = vmatpush.msra.mxu0 0.0
    %302 = vmatpush.msra.mxu0 0.0
    %303 = vmatpush.msra.mxu0 0.0
    %304 = vmatpush.msra.mxu0 0.0
    %305 = vmatpush.msra.mxu0 0.0
    %306 = vmatpush.msra.mxu0 %v85
    %307 = vmatpush.msra.mxu0 %v84
    %308 = vmatpush.msra.mxu0 %v83
    %309 = vmatpush.msra.mxu0 %v82
    %310 = vmatmul.f32.gmra.mxu0 %v292
    %v311 = vpop.f32.mrf.mxu0
    %v312 = vadd.f32 %v291, %v311
    %313 = vdwg.mxu0
    %314 = vst [vmem:[#allocation11] sm:$0xff] %v312
    // Predicated region
    $region22: #{tpu_custom_call.1} parent=1 // pred_check
      _
    $region23: #{tpu_custom_call.1} parent=1 // pred_check_branch
      %316 = sbr.rel (0) target = $region25
    $region24: #{tpu_custom_call.1} parent=1 // pred_region
      %318 = vsyncadd [#allocation8], 0
      %s320 = sshll.u32 [#allocation11], 4
      %s321 = int_to_ptr.vmem [resolvable:$true] %s320
      %s322 = sshll.u32 %s2, 4
      %s323 = int_to_ptr.hbm [resolvable:$true] %s322
      %325 = dma.vmem_to_hbm [thread:$0]  %s321, 128, %s323, [#allocation8]
    $region25: #{tpu_custom_call.1} parent=1 // pred_fallthru
      _
    // Predicated region
    $region26: #{tpu_custom_call.1} parent=1 // pred_check
      _
    $region27: #{tpu_custom_call.1} parent=1 // pred_check_branch
      %327 = sbr.rel (0) target = $region29
    $region28: #{tpu_custom_call.1} parent=1 // pred_region
      %329 = dma.done [#allocation8], 128
    $region29: #{tpu_custom_call.1} parent=1 // pred_fallthru
      _
    %330 = vsyncpa [#allocation7], 1
    %331 = vsyncpa [#allocation10], 1
    %332 = vsyncpa [#allocation8], 1

</llo_original>
